<compile_context>
chip_gen: v5e
topology: v5e:2x2
jax: 0.10.0
libtpu: 0.0.40
codegen_flags: <defaults>
</compile_context>

<pallas_src>
import functools

import jax
import jax.numpy as jnp
from jax.experimental import pallas as pl
from jax.experimental.pallas import tpu as pltpu


def _round_up(x, m):
    return ((x + m - 1) // m) * m


# ---------------------------------------------------------------------------
# Kernel
# ---------------------------------------------------------------------------
def lfmodel_kernel(n_features, p_ref, x_ref, o_ref):
    """One batch tile: o = sigmoid(W3 @ relu(W2 @ relu(W1 @ x + b1) + b2) + b3).

    p_ref : (16, >=128) bf16 packed params, VMEM-resident across grid steps.
    x_ref : (n_features, TB) bf16 input tile (batch on the lane axis).
    o_ref : (2, TB) f32 output tile.
    """
    p = p_ref[...]                                         # tiny, resident
    x = x_ref[...]                                         # (nf, TB) bf16

    # Static slices out of the packed buffer: rows [0:5]=fc1, [5:8]=fc2, [8:10]=fc3,
    # each row block is [W | b].
    w1 = p[0:5, 0:n_features]                              # (5, nf)  bf16
    b1 = p[0:5, n_features:n_features + 1].astype(jnp.float32)
    w2 = p[5:8, 0:5]                                       # (3, 5)   bf16
    b2 = p[5:8, 5:6].astype(jnp.float32)
    w3 = p[8:10, 0:3]                                      # (2, 3)   bf16
    b3 = p[8:10, 3:4].astype(jnp.float32)

    # fc1 + ReLU: MXU matmul with f32 accumulation, ReLU on VPU.
    h1 = jnp.dot(w1, x, preferred_element_type=jnp.float32) + b1      # (5, TB) f32
    h1 = jnp.maximum(h1, 0.0).astype(jnp.bfloat16)
    # fc2 + ReLU
    h2 = jnp.dot(w2, h1, preferred_element_type=jnp.float32) + b2     # (3, TB) f32
    h2 = jnp.maximum(h2, 0.0).astype(jnp.bfloat16)
    # fc3 + sigmoid (EUP)
    z = jnp.dot(w3, h2, preferred_element_type=jnp.float32) + b3      # (2, TB) f32
    o_ref[...] = jax.nn.sigmoid(z)


# ---------------------------------------------------------------------------
# Host-side wrapper
# ---------------------------------------------------------------------------
def pack_params(params, n_features, dtype=jnp.bfloat16):
    """Pack (w1,b1,w2,b2,w3,b3) [PyTorch (out,in)/(out,) layout] into one padded
    VMEM-friendly buffer; row block r holds [W_r | b_r]."""
    w1, b1, w2, b2, w3, b3 = params
    p_rows = 16                                   # 10 used rows, padded to bf16 sublane tile
    p_cols = max(128, _round_up(n_features + 1, 128))
    buf = jnp.zeros((p_rows, p_cols), dtype)
    buf = buf.at[0:5, 0:n_features].set(w1.astype(dtype))
    buf = buf.at[0:5, n_features].set(b1.astype(dtype))
    buf = buf.at[5:8, 0:5].set(w2.astype(dtype))
    buf = buf.at[5:8, 5].set(b2.astype(dtype))
    buf = buf.at[8:10, 0:3].set(w3.astype(dtype))
    buf = buf.at[8:10, 3].set(b3.astype(dtype))
    return buf


def lfmodel_forward(x, params, *, tb=32768):
    """x: (batch, n_features) f32  ->  (batch, 2) f32."""
    batch, n_features = x.shape

    # Batch goes on the lane axis; pad it to a multiple of 128 lanes.
    batch_p = _round_up(batch, 128)
    tb = _round_up(min(tb, batch_p), 128)         # batch tile (lanes per grid step)

    x_t = jnp.pad(x.T.astype(jnp.bfloat16), ((0, 0), (0, batch_p - batch)))
    p_buf = pack_params(params, n_features)

    grid = (pl.cdiv(batch_p, tb),)
    out_t = pl.pallas_call(
        functools.partial(lfmodel_kernel, n_features),
        out_shape=jax.ShapeDtypeStruct((2, batch_p), jnp.float32),
        grid=grid,
        in_specs=[
            # Packed weights/biases: constant block index -> single DMA, resident.
            pl.BlockSpec(p_buf.shape, lambda i: (0, 0)),
            # Input tile: batch on lanes, double-buffered by the pipeline.
            pl.BlockSpec((n_features, tb), lambda i: (0, i)),
        ],
        out_specs=pl.BlockSpec((2, tb), lambda i: (0, i)),
        compiler_params=pltpu.CompilerParams(
            dimension_semantics=("parallel",),    # shards grid across v7x's 2 TCs
        ),
    )(p_buf, x_t)

    return out_t[:, :batch].T                     # (batch, 2)


# ---------------------------------------------------------------------------
# Init + references
# ---------------------------------------------------------------------------
def init_params(key, n_features):
    """nn.Linear-style init, PyTorch layout: W (out,in), b (out,)."""
    dims = [(n_features, 5), (5, 3), (3, 2)]
    params = []
    for fan_in, fan_out in dims:
        key, kw, kb = jax.random.split(key, 3)
        bound = 1.0 / (float(fan_in) ** 0.5)
        w = jax.random.uniform(kw, (fan_out, fan_in), jnp.float32, -bound, bound)
        b = jax.random.uniform(kb, (fan_out,), jnp.float32, -bound, bound)
        params += [w, b]
    return tuple(params)


def reference_forward_f32(x, params):
    w1, b1, w2, b2, w3, b3 = params
    h1 = jax.nn.relu(x @ w1.T + b1)
    h2 = jax.nn.relu(h1 @ w2.T + b2)
    return jax.nn.sigmoid(h2 @ w3.T + b3)


def reference_forward_bf16(x, params):
    """Mirrors the kernel's mixed precision (bf16 inputs, f32 accumulation)."""
    w1, b1, w2, b2, w3, b3 = [p.astype(jnp.bfloat16) for p in params]
    xb = x.astype(jnp.bfloat16)
    h1 = jnp.maximum(jnp.dot(xb, w1.T, preferred_element_type=jnp.float32)
                     + b1.astype(jnp.float32), 0.0).astype(jnp.bfloat16)
    h2 = jnp.maximum(jnp.dot(h1, w2.T, preferred_element_type=jnp.float32)
                     + b2.astype(jnp.float32), 0.0).astype(jnp.bfloat16)
    z = jnp.dot(h2, w3.T, preferred_element_type=jnp.float32) + b3.astype(jnp.float32)
    return jax.nn.sigmoid(z)


# ---------------------------------------------------------------------------
if __name__ == "__main__":
    n_features = 16

    key = jax.random.PRNGKey(0)
    key, kp = jax.random.split(key)
    params = init_params(kp, n_features)

    # Primary small test (batch=8): single grid step, lane padding to 128.
    key, kx = jax.random.split(key)
    x_small = jax.random.normal(kx, (8, n_features), jnp.float32)
    out_small = lfmodel_forward(x_small, params)
    jax.block_until_ready(out_small)
    assert out_small.shape == (8, 2)
    assert jnp.allclose(out_small, reference_forward_bf16(x_small, params),
                        atol=2e-3, rtol=2e-3)
    assert jnp.allclose(out_small, reference_forward_f32(x_small, params),
                        atol=5e-2, rtol=5e-2)

    # Exercise the multi-step pipelined grid (resident weights, moving x tile)
    # with a deliberately small tile.
    key, kx2 = jax.random.split(key)
    x_big = jax.random.normal(kx2, (300, n_features), jnp.float32)
    out_big = lfmodel_forward(x_big, params, tb=128)
    jax.block_until_ready(out_big)
    assert out_big.shape == (300, 2)
    assert jnp.allclose(out_big, reference_forward_bf16(x_big, params),
                        atol=2e-3, rtol=2e-3)

    print("KERNEL_OK")
</pallas_src>

<mosaic_0001>
module attributes {stable_mosaic.version = 11 : i64} {
  func.func @lfmodel_kernel(%arg0: i32, %arg1: memref<16x128xbf16, #tpu.memory_space<vmem>>, %arg2: memref<16x128xbf16, #tpu.memory_space<vmem>>, %arg3: memref<2x128xf32, #tpu.memory_space<vmem>>) attributes {dimension_semantics = [#tpu.dimension_semantics<parallel>], iteration_bounds = array<i64: 1>, scalar_prefetch = 0 : i64, scratch_operands = 0 : i64, tpu.core_type = #tpu.core_type<tc>, window_params = [{pipeline_mode = #tpu.pipeline_mode<synchronous>, transform_indices = @transform_0, window_bounds = array<i64: 16, 128>}, {transform_indices = @transform_1, window_bounds = array<i64: 16, 128>}, {transform_indices = @transform_2, window_bounds = array<i64: 2, 128>}]} {
    %c0 = arith.constant 0 : index
    %c0_0 = arith.constant 0 : index
    %0 = vector.load %arg1[%c0, %c0_0] : memref<16x128xbf16, #tpu.memory_space<vmem>>, vector<16x128xbf16>
    %c0_1 = arith.constant 0 : index
    %c0_2 = arith.constant 0 : index
    %1 = vector.load %arg2[%c0_1, %c0_2] : memref<16x128xbf16, #tpu.memory_space<vmem>>, vector<16x128xbf16>
    %2 = vector.extract_strided_slice %0 {offsets = [0, 0], sizes = [5, 16], strides = [1, 1]} : vector<16x128xbf16> to vector<5x16xbf16>
    %3 = vector.extract_strided_slice %0 {offsets = [0, 16], sizes = [5, 1], strides = [1, 1]} : vector<16x128xbf16> to vector<5x1xbf16>
    %4 = arith.extf %3 : vector<5x1xbf16> to vector<5x1xf32>
    %5 = vector.extract_strided_slice %0 {offsets = [5, 0], sizes = [3, 5], strides = [1, 1]} : vector<16x128xbf16> to vector<3x5xbf16>
    %6 = vector.extract_strided_slice %0 {offsets = [5, 5], sizes = [3, 1], strides = [1, 1]} : vector<16x128xbf16> to vector<3x1xbf16>
    %7 = arith.extf %6 : vector<3x1xbf16> to vector<3x1xf32>
    %8 = vector.extract_strided_slice %0 {offsets = [8, 0], sizes = [2, 3], strides = [1, 1]} : vector<16x128xbf16> to vector<2x3xbf16>
    %9 = vector.extract_strided_slice %0 {offsets = [8, 3], sizes = [2, 1], strides = [1, 1]} : vector<16x128xbf16> to vector<2x1xbf16>
    %10 = arith.extf %9 : vector<2x1xbf16> to vector<2x1xf32>
    %cst = arith.constant dense<0.000000e+00> : vector<5x128xf32>
    %11 = tpu.matmul %2, %1, %cst {dimension_numbers = #tpu.dot_dimension_numbers<[1], [0], [0], [1], [0, 0, 1, 1], [], []>} : vector<5x16xbf16>, vector<16x128xbf16>, vector<5x128xf32> -> vector<5x128xf32>
    %12 = vector.broadcast %4 : vector<5x1xf32> to vector<5x128xf32>
    %13 = arith.addf %11, %12 : vector<5x128xf32>
    %cst_3 = arith.constant 0.000000e+00 : f32
    %14 = vector.broadcast %cst_3 : f32 to vector<5x128xf32>
    %15 = arith.maximumf %13, %14 : vector<5x128xf32>
    %16 = arith.truncf %15 : vector<5x128xf32> to vector<5x128xbf16>
    %cst_4 = arith.constant dense<0.000000e+00> : vector<3x128xf32>
    %17 = tpu.matmul %5, %16, %cst_4 {dimension_numbers = #tpu.dot_dimension_numbers<[1], [0], [0], [1], [0, 0, 1, 1], [], []>} : vector<3x5xbf16>, vector<5x128xbf16>, vector<3x128xf32> -> vector<3x128xf32>
    %18 = vector.broadcast %7 : vector<3x1xf32> to vector<3x128xf32>
    %19 = arith.addf %17, %18 : vector<3x128xf32>
    %cst_5 = arith.constant 0.000000e+00 : f32
    %20 = vector.broadcast %cst_5 : f32 to vector<3x128xf32>
    %21 = arith.maximumf %19, %20 : vector<3x128xf32>
    %22 = arith.truncf %21 : vector<3x128xf32> to vector<3x128xbf16>
    %cst_6 = arith.constant dense<0.000000e+00> : vector<2x128xf32>
    %23 = tpu.matmul %8, %22, %cst_6 {dimension_numbers = #tpu.dot_dimension_numbers<[1], [0], [0], [1], [0, 0, 1, 1], [], []>} : vector<2x3xbf16>, vector<3x128xbf16>, vector<2x128xf32> -> vector<2x128xf32>
    %24 = vector.broadcast %10 : vector<2x1xf32> to vector<2x128xf32>
    %25 = arith.addf %23, %24 : vector<2x128xf32>
    %26 = arith.negf %25 : vector<2x128xf32>
    %27 = math.exp %26 : vector<2x128xf32>
    %cst_7 = arith.constant 1.000000e+00 : f32
    %28 = vector.broadcast %cst_7 : f32 to vector<2x128xf32>
    %29 = arith.addf %28, %27 : vector<2x128xf32>
    %30 = arith.divf %28, %29 : vector<2x128xf32>
    %c0_8 = arith.constant 0 : index
    %c0_9 = arith.constant 0 : index
    %31 = vector.load %arg3[%c0_8, %c0_9] : memref<2x128xf32, #tpu.memory_space<vmem>>, vector<2x128xf32>
    tpu.vector_store %arg3[%c0_8, %c0_9], %30 {strides = array<i32>} : memref<2x128xf32, #tpu.memory_space<vmem>>, vector<2x128xf32>,
    return
  }
  func.func @transform_0(%arg0: i32) -> (i32, i32) {
    %c0_i32 = arith.constant 0 : i32
    %c0_i32_0 = arith.constant 0 : i32
    %c0_i32_1 = arith.constant 0 : i32
    return %c0_i32, %c0_i32_0 : i32, i32
  }
  func.func @transform_1(%arg0: i32) -> (i32, i32) {
    %c0_i32 = arith.constant 0 : i32
    %c0_i32_0 = arith.constant 0 : i32
    return %c0_i32, %arg0 : i32, i32
  }
  func.func @transform_2(%arg0: i32) -> (i32, i32) {
    %c0_i32 = arith.constant 0 : i32
    %c0_i32_0 = arith.constant 0 : i32
    return %c0_i32, %arg0 : i32, i32
  }
}

</mosaic_0001>

<llo_original>
// kernel: tpu_custom_call.1
$region0: #{tpu_custom_call.1}
  #allocation0 [shape = 'u32[]', space=smem, size = 0x4, offset = 0x4, fixed_abs, tag = 'smem constant byte address 0x4 - core index']
  #allocation1 [shape = 'u32[72,128]{1,0:T(1,128)}', space=vmem, size = 0x9000, scoped, tag = 'internal scratch']
  %s0 = inlined_call_operand.hbm [shape: bf16[16,128], index: 0, kind: input, shape index: {}]
  %s1 = inlined_call_operand.hbm [shape: bf16[16,128], index: 1, kind: input, shape index: {}]
  %s2 = inlined_call_operand.hbm [shape: f32[2,128], index: 2, kind: output, shape index: {}]
  %s3 = sld [smem:[#allocation0]]
  $region26: #{tpu_custom_call.1} parent=0
    _
  %s5 = ssub.s32 1, %s3
  %s6 = scalar_select 0, %s5, %s3
  $region1: #{tpu_custom_call.1} parent=0
    #allocation2 [shape = 'u8[4096]{0}', space=vmem, size = 0x1000, scoped, tag = 'input window, operand 0, single buffered']
    #allocation3 [shape = 's32[1]{0}', space=sflag, size = 0x4, scoped, tag = 'scoped memory for tpu_custom_call.1']
    #allocation4 [shape = 's32[1]{0}', space=sflag, size = 0x4, scoped, tag = 'scoped memory for tpu_custom_call.1']
    #allocation5 [shape = 'u8[4096]{0}', space=vmem, size = 0x1000, scoped, tag = 'input window, operand 1, single buffered']
    #allocation6 [shape = 's32[1]{0}', space=sflag, size = 0x4, scoped, tag = 'scoped memory for tpu_custom_call.1']
    #allocation7 [shape = 'u8[1024]{0}', space=vmem, size = 0x400, scoped, tag = 'output window, operand 0, single buffered']
    %7 = vsyncpa [#allocation3], 0
    %8 = vsyncpa [#allocation6], 0
    %9 = vsyncpa [#allocation4], 0
    // Predicated region
    $region2: #{tpu_custom_call.1} parent=1 // pred_check
      _
    $region3: #{tpu_custom_call.1} parent=1 // pred_check_branch
      %11 = sbr.rel (0) target = $region5
    $region4: #{tpu_custom_call.1} parent=1 // pred_region
      %13 = vsyncadd [#allocation3], 0
      %s14 = sshll.u32 %s0, 4
      %s15 = int_to_ptr.hbm [resolvable:$true] %s14
      %s16 = sshll.u32 [#allocation2], 4
      %s17 = int_to_ptr.vmem [resolvable:$true] %s16
      %22 = dma.hbm_to_vmem [thread:$0]  %s15, 128, %s17, [#allocation3], 64, 64, 4
    $region5: #{tpu_custom_call.1} parent=1 // pred_fallthru
      _
    // Predicated region
    $region6: #{tpu_custom_call.1} parent=1 // pred_check
      _
    $region7: #{tpu_custom_call.1} parent=1 // pred_check_branch
      %24 = sbr.rel (0) target = $region9
    $region8: #{tpu_custom_call.1} parent=1 // pred_region
      %26 = vsyncadd [#allocation6], 0
      %s27 = sshll.u32 %s1, 4
      %s28 = int_to_ptr.hbm [resolvable:$true] %s27
      %s29 = sshll.u32 [#allocation5], 4
      %s30 = int_to_ptr.vmem [resolvable:$true] %s29
      %35 = dma.hbm_to_vmem [thread:$0]  %s28, 128, %s30, [#allocation6], 64, 64, 4
    $region9: #{tpu_custom_call.1} parent=1 // pred_fallthru
      _
    // Predicated region
    $region10: #{tpu_custom_call.1} parent=1 // pred_check
      _
    $region11: #{tpu_custom_call.1} parent=1 // pred_check_branch
      %37 = sbr.rel (0) target = $region13
    $region12: #{tpu_custom_call.1} parent=1 // pred_region
      %39 = dma.done [#allocation3], 128
    $region13: #{tpu_custom_call.1} parent=1 // pred_fallthru
      _
    // Predicated region
    $region14: #{tpu_custom_call.1} parent=1 // pred_check
      _
    $region15: #{tpu_custom_call.1} parent=1 // pred_check_branch
      %41 = sbr.rel (0) target = $region17
    $region16: #{tpu_custom_call.1} parent=1 // pred_region
      %43 = dma.done [#allocation6], 128
    $region17: #{tpu_custom_call.1} parent=1 // pred_fallthru
      _
    %v45 = vld [vmem:[#allocation2] sm:$0xf]
    %v46 = vld [vmem:[#allocation2 + $0x4] sm:$0xf]
    %v47 = vld [vmem:[#allocation5] sm:$0xf]
    %v48 = vld [vmem:[#allocation5 + $0x4] sm:$0xf]
    %v49 = vunpack.c.l.bf16 %v45
    %v50 = vunpack.c.l.bf16 %v46
    %52 = vset.pattern.permute.xlu0 16
    %53 = vperm.xlu0 %52, %v49
    %v54 = vpop.permute.xlu0 %53
    %v58 = vunpack.c.l.b16 %v47
    %v59 = vunpack.c.l.b16 %v48
    %v60 = vpack.c.b16 %v59, %v58
    %vm62 = vcmask 130048
    %v64 = vsel %vm62, %v45, 0
    %66 = vmatpush.bf16.msra.mxu0 0
    %67 = vmatpush.bf16.msra.mxu0 0
    %68 = vmatpush.bf16.msra.mxu0 0
    %69 = vmatpush.bf16.msra.mxu0 0
    %70 = vmatpush.bf16.msra.mxu0 0
    %71 = vmatpush.bf16.msra.mxu0 0
    %72 = vmatpush.bf16.msra.mxu0 0
    %73 = vmatpush.bf16.msra.mxu0 %v60
    %74 = vmatmul.bf16.gmra.mxu0 %v64
    %v75 = vpop.f32.mrf.mxu0
    %v76 = vadd.f32 %v54, %v75
    %v77 = vpop.f32.mrf.mxu0
    %78 = vdwg.mxu0
    %v79 = vmax.f32 %v76, 0.0
    %v80 = vpack.c.bf16 %v79, %v79
    %81 = vset.pattern.permute.xlu0 5
    %82 = vperm.xlu0 %81, %v49
    %v83 = vpop.permute.xlu0 %82
    %v85 = vunpack.c.l.b16 %v45
    %v86 = vpack.c.b16 %v85, %v85
    %v88 = vshrl.u32 %v86, 16
    %v90 = vrot.slane %v88, 2
    %v91 = vshll.u32 %v86, 16
    %v93 = vrot.slane %v91, 3
    %v94 = vor.u32 %v90, %v93
    %v95 = vrot.slane %v83, 5
    %vm97 = vcmask 39936
    %v99 = vsel %vm97, %v94, 0
    %vm101 = vcmask 1041408
    %vm102 = vcmask 1042432
    %v103 = vsel %vm101, 4294967295, 65535
    %v104 = vsel %vm102, %v103, 0
    %v106 = vand.u32 %v80, %v104
    %108 = vmatpush.bf16.msra.mxu0 0
    %109 = vmatpush.bf16.msra.mxu0 0
    %110 = vmatpush.bf16.msra.mxu0 0
    %111 = vmatpush.bf16.msra.mxu0 0
    %112 = vmatpush.bf16.msra.mxu0 0
    %113 = vmatpush.bf16.msra.mxu0 0
    %114 = vmatpush.bf16.msra.mxu0 0
    %115 = vmatpush.bf16.msra.mxu0 %v106
    %116 = vmatmul.bf16.gmra.mxu0 %v99
    %v117 = vpop.f32.mrf.mxu0
    %v118 = vadd.f32 %v95, %v117
    %v119 = vpop.f32.mrf.mxu0
    %120 = vdwg.mxu0
    %v121 = vmax.f32 %v118, 0.0
    %v122 = vpack.c.bf16 %v121, %v121
    %124 = vset.pattern.permute.xlu0 3
    %125 = vperm.xlu0 %124, %v50
    %v126 = vpop.permute.xlu0 %125
    %vm128 = vcmask 23552
    %v130 = vsel %vm128, %v46, 0
    %vm132 = vcmask 1040384
    %v133 = vsel %vm132, 4294967295, 65535
    %v134 = vsel %vm101, %v133, 0
    %v136 = vand.u32 %v122, %v134
    %138 = vmatpush.bf16.msra.mxu0 0
    %139 = vmatpush.bf16.msra.mxu0 0
    %140 = vmatpush.bf16.msra.mxu0 0
    %141 = vmatpush.bf16.msra.mxu0 0
    %142 = vmatpush.bf16.msra.mxu0 0
    %143 = vmatpush.bf16.msra.mxu0 0
    %144 = vmatpush.bf16.msra.mxu0 0
    %145 = vmatpush.bf16.msra.mxu0 %v136
    %146 = vmatmul.bf16.gmra.mxu0 %v130
    %v147 = vpop.f32.mrf.mxu0
    %v148 = vadd.f32 %v126, %v147
    %v149 = vpop.f32.mrf.mxu0
    %150 = vdwg.mxu0
    %v151 = vxor.u32 %v148, 2147483648
    %v152 = vmul.f32 %v151, 1.442695
    %v153 = vpow.pop %v152
    %v154 = vadd.f32 %v153, 1.0
    %v155 = vrcp.pop %v154
    %v156 = vmul.f32 %v154, %v155
    %v157 = vsub.f32 1.0, %v156
    %v158 = vmul.f32 %v155, %v157
    %v159 = vadd.f32 %v155, %v158
    %vm160 = vweird.f32 %v154
    %vm161 = vweird.f32 %v155
    %vm162 = vmor %vm160, %vm161
    %v163 = vsel %vm162, %v155, %v159
    %v164 = vand.u32 2147483647, %v154
    %vm165 = vcmp.eq.f32.partialorder %v164, 8.507059e+37
    %v166 = vand.u32 %v154, 2147483648
    %v167 = vor.u32 1.1754944e-38, %v166
    %v168 = vsel %vm165, %v167, %v163
    %v169 = vmul.f32 1.0, %v168
    %170 = vst [vmem:[#allocation7] sm:$0x3] %v169
    // Predicated region
    $region18: #{tpu_custom_call.1} parent=1 // pred_check
      _
    $region19: #{tpu_custom_call.1} parent=1 // pred_check_branch
      %172 = sbr.rel (0) target = $region21
    $region20: #{tpu_custom_call.1} parent=1 // pred_region
      %174 = vsyncadd [#allocation4], 0
      %s176 = sshll.u32 [#allocation7], 4
      %s177 = int_to_ptr.vmem [resolvable:$true] %s176
      %s178 = sshll.u32 %s2, 4
      %s179 = int_to_ptr.hbm [resolvable:$true] %s178
      %181 = dma.vmem_to_hbm [thread:$0]  %s177, 32, %s179, [#allocation4]
    $region21: #{tpu_custom_call.1} parent=1 // pred_fallthru
      _
    // Predicated region
    $region22: #{tpu_custom_call.1} parent=1 // pred_check
      _
    $region23: #{tpu_custom_call.1} parent=1 // pred_check_branch
      %183 = sbr.rel (0) target = $region25
    $region24: #{tpu_custom_call.1} parent=1 // pred_region
      %185 = dma.done [#allocation4], 32
    $region25: #{tpu_custom_call.1} parent=1 // pred_fallthru
      _
    %186 = vsyncpa [#allocation3], 1
    %187 = vsyncpa [#allocation6], 1
    %188 = vsyncpa [#allocation4], 1

</llo_original>
